<compile_context>
chip_gen: v6e
topology: v6e:2x2x1
jax: 0.10.0
libtpu: 0.0.40
codegen_flags: <defaults>
</compile_context>

<pallas_src>
import jax
import jax.numpy as jnp
import numpy as np
from jax.experimental import pallas as pl
from jax.experimental.pallas import tpu as pltpu


def _round_up(x: int, m: int) -> int:
    return ((x + m - 1) // m) * m


# ------------------------------------------------------------------ #
# Parameter / constant construction (deterministic, in-script)
# ------------------------------------------------------------------ #
def hann_window(win_length: int) -> np.ndarray:
    # torch.hann_window default: periodic=True
    k = np.arange(win_length, dtype=np.float64)
    return (0.5 * (1.0 - np.cos(2.0 * np.pi * k / win_length))).astype(np.float32)


def melscale_fbanks_htk(n_freqs: int, f_min: float, f_max: float, n_mels: int,
                        sample_rate: int) -> np.ndarray:
    """HTK mel filterbank, norm=None. Returns (n_freqs, n_mels)."""
    def hz_to_mel(f):
        return 2595.0 * np.log10(1.0 + f / 700.0)

    def mel_to_hz(m):
        return 700.0 * (10.0 ** (m / 2595.0) - 1.0)

    all_freqs = np.linspace(0.0, sample_rate // 2, n_freqs)
    m_pts = np.linspace(hz_to_mel(f_min), hz_to_mel(f_max), n_mels + 2)
    f_pts = mel_to_hz(m_pts)

    f_diff = f_pts[1:] - f_pts[:-1]                       # (n_mels + 1,)
    slopes = f_pts[None, :] - all_freqs[:, None]          # (n_freqs, n_mels + 2)
    down = -slopes[:, :-2] / f_diff[:-1]
    up = slopes[:, 2:] / f_diff[1:]
    return np.maximum(0.0, np.minimum(down, up)).astype(np.float32)


def dft_matrix_padded(n_fft: int, win_length: int, n_fft_pad: int,
                      n_freq_pad: int) -> np.ndarray:
    """Windowed real-DFT matrix [win*cos | win*sin], zero padded to
    (n_fft_pad, 2*n_freq_pad) so every lane dim is a multiple of 128."""
    n_freq = n_fft // 2 + 1
    # torch.stft centers a shorter window inside n_fft.
    window = np.zeros(n_fft, dtype=np.float64)
    left = (n_fft - win_length) // 2
    window[left:left + win_length] = hann_window(win_length).astype(np.float64)

    k = np.arange(n_fft, dtype=np.float64)[:, None]
    f = np.arange(n_freq, dtype=np.float64)[None, :]
    ang = 2.0 * np.pi * k * f / n_fft
    cos_m = window[:, None] * np.cos(ang)
    sin_m = window[:, None] * np.sin(ang)

    out = np.zeros((n_fft_pad, 2 * n_freq_pad), dtype=np.float32)
    out[:n_fft, :n_freq] = cos_m
    out[:n_fft, n_freq_pad:n_freq_pad + n_freq] = sin_m
    return out


# ------------------------------------------------------------------ #
# Pallas kernel: power spectrogram + mel projection (+ layout transpose)
# ------------------------------------------------------------------ #
def mel_spec_kernel(frames_ref, dft_ref, fb_ref, out_ref):
    # frames_ref: (1, TF, n_fft_pad)        compute dtype (bf16 or f32)
    # dft_ref   : (n_fft_pad, 2*n_freq_pad) compute dtype, [cos | sin]
    # fb_ref    : (n_freq_pad, n_mels_pad)  f32
    # out_ref   : (1, n_mels_pad, TF)       f32
    n_freq_pad = fb_ref.shape[0]

    x = frames_ref[0]                                                    # (TF, n_fft_pad)
    # Single MXU pass over the frames tile: real and imag parts together.
    reim = jnp.dot(x, dft_ref[...], preferred_element_type=jnp.float32)  # (TF, 2*n_freq_pad)
    re = reim[:, :n_freq_pad]
    im = reim[:, n_freq_pad:]
    spec = re * re + im * im                                             # power=2, f32
    mel = jnp.dot(spec, fb_ref[...], preferred_element_type=jnp.float32) # (TF, n_mels_pad)
    # Emit the PyTorch (..., n_mels, time) layout directly; transpose rides the XLU.
    out_ref[0] = mel.T                                                   # (n_mels_pad, TF)


def mel_spec_pallas(frames: jax.Array, dftmat: jax.Array, fb: jax.Array,
                    *, frame_tile: int) -> jax.Array:
    B, n_frames_pad, n_fft_pad = frames.shape
    n_freq_pad, n_mels_pad = fb.shape
    two_freq = dftmat.shape[1]
    n_tiles = n_frames_pad // frame_tile

    flops = (2 * B * n_frames_pad * n_fft_pad * two_freq
             + 2 * B * n_frames_pad * n_freq_pad * n_mels_pad)
    bytes_accessed = (frames.size * frames.dtype.itemsize
                      + dftmat.size * dftmat.dtype.itemsize
                      + fb.size * fb.dtype.itemsize
                      + B * n_mels_pad * n_frames_pad * 4)

    return pl.pallas_call(
        mel_spec_kernel,
        out_shape=jax.ShapeDtypeStruct((B, n_mels_pad, n_frames_pad), jnp.float32),
        grid_spec=pltpu.PrefetchScalarGridSpec(
            num_scalar_prefetch=0,
            grid=(B, n_tiles),
            in_specs=[
                # Frame tile: bounded VMEM, many pipeline steps.
                pl.BlockSpec((1, frame_tile, n_fft_pad), lambda b, t: (b, t, 0)),
                # Grid-invariant constants: fetched once, stay VMEM resident.
                pl.BlockSpec((n_fft_pad, two_freq), lambda b, t: (0, 0)),
                pl.BlockSpec((n_freq_pad, n_mels_pad), lambda b, t: (0, 0)),
            ],
            out_specs=pl.BlockSpec((1, n_mels_pad, frame_tile),
                                   lambda b, t: (b, 0, t)),
        ),
        compiler_params=pltpu.CompilerParams(
            dimension_semantics=("parallel", "parallel"),
            vmem_limit_bytes=32 * 1024 * 1024),
        cost_estimate=pl.CostEstimate(
            flops=flops, transcendentals=0, bytes_accessed=bytes_accessed),
    )(frames, dftmat, fb)


# ------------------------------------------------------------------ #
# Full MelSpectrogram forward (glue in JAX, hot path in Pallas)
# ------------------------------------------------------------------ #
class MelSpectrogramPallas:
    def __init__(self, sample_rate=16000, n_fft=400, win_length=None,
                 hop_length=None, f_min=0.0, f_max=None, n_mels=128,
                 compute_dtype=jnp.bfloat16, frame_tile=256):
        self.sample_rate = sample_rate
        self.n_fft = n_fft
        self.win_length = win_length if win_length is not None else n_fft
        self.hop_length = hop_length if hop_length is not None else self.win_length // 2
        self.n_mels = n_mels
        self.f_min = f_min
        self.f_max = f_max if f_max is not None else float(sample_rate // 2)
        self.compute_dtype = compute_dtype
        assert frame_tile % 128 == 0, "frame_tile must be a multiple of 128"
        self.frame_tile = frame_tile

        # TPU-friendly padded sizes (lane-dense everywhere; zero padding is inert).
        self.n_freq = self.n_fft // 2 + 1
        self.n_fft_pad = _round_up(self.n_fft, 128)
        self.n_freq_pad = _round_up(self.n_freq, 128)
        self.n_mels_pad = _round_up(self.n_mels, 128)

        dft = dft_matrix_padded(self.n_fft, self.win_length,
                                self.n_fft_pad, self.n_freq_pad)
        fb = melscale_fbanks_htk(self.n_freq, self.f_min, self.f_max,
                                 self.n_mels, self.sample_rate)
        fb_pad = np.zeros((self.n_freq_pad, self.n_mels_pad), dtype=np.float32)
        fb_pad[:self.n_freq, :self.n_mels] = fb

        # bf16 (default) DFT matrix -> native MXU path with f32 accumulation.
        self.dftmat = jnp.asarray(dft, dtype=compute_dtype)
        self.fb = jnp.asarray(fb_pad)               # f32: square + mel stay f32
        self.fb_unpadded = jnp.asarray(fb)          # for reference checks

    def __call__(self, waveform: jax.Array) -> jax.Array:
        # waveform: (..., time) float32
        lead = waveform.shape[:-1]
        T = waveform.shape[-1]
        x = waveform.reshape((-1, T)).astype(jnp.float32)          # (B, T)

        # center=True reflect padding by n_fft // 2 (torch.stft semantics)
        pad = self.n_fft // 2
        x = jnp.pad(x, ((0, 0), (pad, pad)), mode="reflect")       # (B, T + 2*pad)

        # frame extraction
        # TODO(synk): frame in-kernel from a contiguous waveform slab
        # (memory_space=pl.ANY + manual DMA) to avoid materializing the
        # overlapped-frame gather (~2x waveform bytes at hop=n_fft/2) in HBM.
        n_frames = 1 + (x.shape[-1] - self.n_fft) // self.hop_length
        idx = (jnp.arange(n_frames)[:, None] * self.hop_length
               + jnp.arange(self.n_fft)[None, :])                  # (n_frames, n_fft)
        frames = x[:, idx]                                         # (B, n_frames, n_fft)

        # Pad frame count to the tile size and frame length to n_fft_pad (zeros inert).
        n_frames_pad = _round_up(n_frames, 8)
        if n_frames_pad <= self.frame_tile:
            tf = n_frames_pad                                      # single tile / batch
        else:
            tf = self.frame_tile
            n_frames_pad = _round_up(n_frames, tf)
        frames = jnp.pad(frames, ((0, 0),
                                  (0, n_frames_pad - n_frames),
                                  (0, self.n_fft_pad - self.n_fft)))
        frames = frames.astype(self.compute_dtype)

        mel = mel_spec_pallas(frames, self.dftmat, self.fb, frame_tile=tf)
        mel = mel[:, :self.n_mels, :n_frames]                      # drop padding
        return mel.reshape(lead + mel.shape[1:])                   # (..., n_mels, n_frames)


# ------------------------------------------------------------------ #
if __name__ == "__main__":
    # Small, deterministic example: batch=2, channels=4, time=256
    key = jax.random.PRNGKey(0)
    waveform = jax.random.normal(key, (2, 4, 256), dtype=jnp.float32)

    n_fft = 64
    n_mels = 16
    hop = n_fft // 2

    def reference(wav, fb_unpadded):
        pad = n_fft // 2
        xw = jnp.pad(wav.reshape(-1, wav.shape[-1]), ((0, 0), (pad, pad)),
                     mode="reflect")
        n_frames = 1 + (xw.shape[-1] - n_fft) // hop
        idx = jnp.arange(n_frames)[:, None] * hop + jnp.arange(n_fft)[None, :]
        frames_ref = xw[:, idx] * jnp.asarray(hann_window(n_fft))
        spec_ref = jnp.abs(jnp.fft.rfft(frames_ref, axis=-1)) ** 2
        mel_ref = jnp.einsum("btf,fm->bmt", spec_ref, fb_unpadded)
        return mel_ref.reshape(wav.shape[:-1] + mel_ref.shape[1:])

    # f32 compute path: strict check against the rfft reference.
    t_f32 = MelSpectrogramPallas(sample_rate=16000, n_fft=n_fft, n_mels=n_mels,
                                 compute_dtype=jnp.float32)
    out_f32 = jax.block_until_ready(t_f32(waveform))
    mel_ref = reference(waveform, t_f32.fb_unpadded)
    np.testing.assert_allclose(np.asarray(out_f32), np.asarray(mel_ref),
                               rtol=1e-3, atol=1e-3)

    # bf16 MXU path (default, fast): sanity check with mixed-precision tolerance.
    t_bf16 = MelSpectrogramPallas(sample_rate=16000, n_fft=n_fft, n_mels=n_mels)
    out_bf16 = jax.block_until_ready(t_bf16(waveform))
    np.testing.assert_allclose(np.asarray(out_bf16), np.asarray(mel_ref),
                               rtol=5e-2, atol=0.5)

    print("KERNEL_OK")
</pallas_src>

<mosaic_0001>
module attributes {stable_mosaic.version = 11 : i64} {
  func.func @mel_spec_kernel(%arg0: i32, %arg1: i32, %arg2: memref<1x16x128xf32, #tpu.memory_space<vmem>>, %arg3: memref<128x256xf32, #tpu.memory_space<vmem>>, %arg4: memref<128x128xf32, #tpu.memory_space<vmem>>, %arg5: memref<1x128x16xf32, #tpu.memory_space<vmem>>) attributes {dimension_semantics = [#tpu.dimension_semantics<parallel>, #tpu.dimension_semantics<parallel>], iteration_bounds = array<i64: 8, 1>, scalar_prefetch = 0 : i64, scratch_operands = 0 : i64, tpu.core_type = #tpu.core_type<tc>, window_params = [{transform_indices = @transform_0, window_bounds = array<i64: 1, 16, 128>}, {pipeline_mode = #tpu.pipeline_mode<synchronous>, transform_indices = @transform_1, window_bounds = array<i64: 128, 256>}, {pipeline_mode = #tpu.pipeline_mode<synchronous>, transform_indices = @transform_2, window_bounds = array<i64: 128, 128>}, {transform_indices = @transform_3, window_bounds = array<i64: 1, 128, 16>}]} {
    %c0 = arith.constant 0 : index
    %c0_0 = arith.constant 0 : index
    %c0_1 = arith.constant 0 : index
    %0 = vector.load %arg2[%c0, %c0_0, %c0_1] : memref<1x16x128xf32, #tpu.memory_space<vmem>>, vector<1x16x128xf32>
    %1 = vector.shape_cast %0 : vector<1x16x128xf32> to vector<16x128xf32>
    %c0_2 = arith.constant 0 : index
    %c0_3 = arith.constant 0 : index
    %2 = vector.load %arg3[%c0_2, %c0_3] : memref<128x256xf32, #tpu.memory_space<vmem>>, vector<128x256xf32>
    %cst = arith.constant dense<0.000000e+00> : vector<16x256xf32>
    %3 = tpu.matmul %1, %2, %cst {dimension_numbers = #tpu.dot_dimension_numbers<[1], [0], [0], [1], [0, 0, 1, 1], [], []>} : vector<16x128xf32>, vector<128x256xf32>, vector<16x256xf32> -> vector<16x256xf32>
    %4 = vector.extract_strided_slice %3 {offsets = [0, 0], sizes = [16, 128], strides = [1, 1]} : vector<16x256xf32> to vector<16x128xf32>
    %5 = vector.extract_strided_slice %3 {offsets = [0, 128], sizes = [16, 128], strides = [1, 1]} : vector<16x256xf32> to vector<16x128xf32>
    %6 = arith.mulf %4, %4 : vector<16x128xf32>
    %7 = arith.mulf %5, %5 : vector<16x128xf32>
    %8 = arith.addf %6, %7 : vector<16x128xf32>
    %c0_4 = arith.constant 0 : index
    %c0_5 = arith.constant 0 : index
    %9 = vector.load %arg4[%c0_4, %c0_5] : memref<128x128xf32, #tpu.memory_space<vmem>>, vector<128x128xf32>
    %cst_6 = arith.constant dense<0.000000e+00> : vector<16x128xf32>
    %10 = tpu.matmul %8, %9, %cst_6 {dimension_numbers = #tpu.dot_dimension_numbers<[1], [0], [0], [1], [0, 0, 1, 1], [], []>} : vector<16x128xf32>, vector<128x128xf32>, vector<16x128xf32> -> vector<16x128xf32>
    %11 = tpu.transpose %10, [1, 0] : vector<16x128xf32> -> vector<128x16xf32>
    %c0_7 = arith.constant 0 : index
    %c0_8 = arith.constant 0 : index
    %c0_9 = arith.constant 0 : index
    %12 = vector.load %arg5[%c0_7, %c0_8, %c0_9] : memref<1x128x16xf32, #tpu.memory_space<vmem>>, vector<1x128x16xf32>
    %13 = vector.shape_cast %12 : vector<1x128x16xf32> to vector<128x16xf32>
    %14 = vector.shape_cast %11 : vector<128x16xf32> to vector<1x128x16xf32>
    tpu.vector_store %arg5[%c0_7, %c0_8, %c0_9], %14 {strides = array<i32>} : memref<1x128x16xf32, #tpu.memory_space<vmem>>, vector<1x128x16xf32>,
    return
  }
  func.func @transform_0(%arg0: i32, %arg1: i32) -> (i32, i32, i32) {
    %c0_i32 = arith.constant 0 : i32
    %c0_i32_0 = arith.constant 0 : i32
    return %arg0, %arg1, %c0_i32 : i32, i32, i32
  }
  func.func @transform_1(%arg0: i32, %arg1: i32) -> (i32, i32) {
    %c0_i32 = arith.constant 0 : i32
    %c0_i32_0 = arith.constant 0 : i32
    %c0_i32_1 = arith.constant 0 : i32
    return %c0_i32, %c0_i32_0 : i32, i32
  }
  func.func @transform_2(%arg0: i32, %arg1: i32) -> (i32, i32) {
    %c0_i32 = arith.constant 0 : i32
    %c0_i32_0 = arith.constant 0 : i32
    %c0_i32_1 = arith.constant 0 : i32
    return %c0_i32, %c0_i32_0 : i32, i32
  }
  func.func @transform_3(%arg0: i32, %arg1: i32) -> (i32, i32, i32) {
    %c0_i32 = arith.constant 0 : i32
    %c0_i32_0 = arith.constant 0 : i32
    return %arg0, %c0_i32, %arg1 : i32, i32, i32
  }
}

</mosaic_0001>

<llo_original>
// kernel: tpu_custom_call.1
$region0: #{tpu_custom_call.1}
  #allocation0 [shape = 'u32[]', space=smem, size = 0x4, offset = 0x4, fixed_abs, tag = 'smem constant byte address 0x4 - core index']
  #allocation1 [shape = 'u32[144,128]{1,0:T(1,128)}', space=vmem, size = 0x12000, scoped, tag = 'internal scratch']
  %s0 = inlined_call_operand.hbm [shape: f32[8,16,128], index: 0, kind: input, shape index: {}]
  %s1 = inlined_call_operand.hbm [shape: f32[128,256], index: 1, kind: input, shape index: {}]
  %s2 = inlined_call_operand.hbm [shape: f32[128,128], index: 2, kind: input, shape index: {}]
  %s3 = inlined_call_operand.vmem [shape: f32[8,128,16], index: 3, kind: output, shape index: {}]
  %s4 = sld [smem:[#allocation0]]
  $region57: #{tpu_custom_call.1} parent=0
    _
  %s6 = ssub.s32 1, %s4
  %s7 = scalar_select 0, %s6, %s4
  $region1: #{tpu_custom_call.1} parent=0
    #allocation2 [shape = 'u8[16384]{0}', space=vmem, size = 0x4000, scoped, tag = 'input window, operand 0']
    #allocation3 [shape = 's32[2]{0}', space=sflag, size = 0x8, scoped, tag = 'scoped memory for tpu_custom_call.1']
    #allocation4 [shape = 'u8[131072]{0}', space=vmem, size = 0x20000, scoped, tag = 'input window, operand 1, single buffered']
    #allocation5 [shape = 's32[1]{0}', space=sflag, size = 0x4, scoped, tag = 'scoped memory for tpu_custom_call.1']
    #allocation6 [shape = 'u8[65536]{0}', space=vmem, size = 0x10000, scoped, tag = 'input window, operand 2, single buffered']
    %8 = vsyncpa [#allocation3], 0
    %s9 = scalar_lea.sflag [#allocation3], 1
    %10 = vsyncpa %s9, 0
    %11 = vsyncpa [#allocation5], 0
    loop: start=0, step=1, limit=10
    $region2: #{tpu_custom_call.1} parent=1 // loop_pre_header
      _
    $region3: #{tpu_custom_call.1} parent=1 // loop_header
      %s13 = sphi 0, %s17
      %p14 = scmp.ge.s32.totalorder %s13, 10
      %s20 = sphi 0, %s32
      %s21 = sphi 0, %s28
      %s22 = sphi 0, %s20
      %s23 = sphi 0, %s21
      %s24 = sphi 0, %s22
      %s25 = sphi 0, %s23
      %s37 = sphi 0, %s39
      %s40 = sphi 0, %s37
      %s41 = sphi 0, %s40
      %s57 = sphi 0, %s41
      %s61 = sphi 0, %s61
      %s63 = sphi 0, %s61
      %s64 = sphi 0, %s63
      %s78 = sphi 0, %s64
      %s82 = sphi 0, %s82
      %s84 = sphi 0, %s82
      %s85 = sphi 0, %s84
      %s99 = sphi 0, %s85
      %s107 = sphi 0, %s109
      %s110 = sphi 0, %s107
      %s111 = sphi 0, %s110
      %s127 = sphi 0, %s111
    $region4: #{tpu_custom_call.1} parent=1 // loop_header_branch
      %16 = sbr.rel (%p14) target = $region8
    $region5: #{tpu_custom_call.1} parent=1 // loop_body
      %s18 = ssub.s32 %s13, 1
      %s19 = ssub.s32 %s13, 2
      %s26 = sadd.s32 1, %s21
      %p27 = scmp.ge.s32.totalorder %s26, 1
      %s28 = scalar_select %p27, 0, %s26
      %s29 = sadd.s32 1, %s20
      %s30 = scalar_select %p27, %s29, %s20
      %p31 = scmp.ge.s32.totalorder %s30, 8
      %s32 = scalar_select %p31, 0, %s30
      %s33 = ssub.s32 %s20, %s32
      %s34 = ssub.s32 %s21, %s28
      %s35 = sor.u32 %s33, %s34
      %p36 = scmp.eq.s32.totalorder %s35, 0
      %s38 = sadd.s32 %s37, 1
      %s39 = scalar_select %p36, %s37, %s38
      %p42 = pneg %p36
      %p43 = scmp.eq.s32.totalorder %s13, 7
      %p44 = por %p42, %p43
      %p45 = scmp.ne.s32.totalorder %s37, %s40
      %p46 = scmp.eq.s32.totalorder %s13, 0
      %p47 = por %p45, %p46
      %p48 = scmp.ne.s32.totalorder %s37, %s40
      %p49 = scmp.eq.s32.totalorder %s18, 7
      %p50 = por %p48, %p49
      %p51 = scmp.ne.s32.totalorder %s40, %s41
      %p52 = scmp.eq.s32.totalorder %s18, 0
      %p53 = por %p51, %p52
      %p54 = scmp.ne.s32.totalorder %s40, %s41
      %p55 = scmp.eq.s32.totalorder %s19, 7
      %p56 = por %p54, %p55
      %p58 = scmp.ne.s32.totalorder %s41, %s57
      %p59 = scmp.eq.s32.totalorder %s19, 0
      %p60 = por %p58, %p59
      %s62 = sadd.s32 %s61, 1
      %p65 = scmp.eq.s32.totalorder %s13, 7
      %p66 = scmp.ne.s32.totalorder %s61, %s63
      %p67 = scmp.eq.s32.totalorder %s13, 0
      %p68 = por %p66, %p67
      %p69 = scmp.ne.s32.totalorder %s61, %s63
      %p70 = scmp.eq.s32.totalorder %s18, 7
      %p71 = por %p69, %p70
      %p72 = scmp.ne.s32.totalorder %s63, %s64
      %p73 = scmp.eq.s32.totalorder %s18, 0
      %p74 = por %p72, %p73
      %p75 = scmp.ne.s32.totalorder %s63, %s64
      %p76 = scmp.eq.s32.totalorder %s19, 7
      %p77 = por %p75, %p76
      %p79 = scmp.ne.s32.totalorder %s64, %s78
      %p80 = scmp.eq.s32.totalorder %s19, 0
      %p81 = por %p79, %p80
      %s83 = sadd.s32 %s82, 1
      %p86 = scmp.eq.s32.totalorder %s13, 7
      %p87 = scmp.ne.s32.totalorder %s82, %s84
      %p88 = scmp.eq.s32.totalorder %s13, 0
      %p89 = por %p87, %p88
      %p90 = scmp.ne.s32.totalorder %s82, %s84
      %p91 = scmp.eq.s32.totalorder %s18, 7
      %p92 = por %p90, %p91
      %p93 = scmp.ne.s32.totalorder %s84, %s85
      %p94 = scmp.eq.s32.totalorder %s18, 0
      %p95 = por %p93, %p94
      %p96 = scmp.ne.s32.totalorder %s84, %s85
      %p97 = scmp.eq.s32.totalorder %s19, 7
      %p98 = por %p96, %p97
      %p100 = scmp.ne.s32.totalorder %s85, %s99
      %p101 = scmp.eq.s32.totalorder %s19, 0
      %p102 = por %p100, %p101
      %s103 = ssub.s32 %s20, %s32
      %s104 = ssub.s32 %s21, %s28
      %s105 = sor.u32 %s103, %s104
      %p106 = scmp.eq.s32.totalorder %s105, 0
      %s108 = sadd.s32 %s107, 1
      %s109 = scalar_select %p106, %s107, %s108
      %p112 = pneg %p106
      %p113 = scmp.eq.s32.totalorder %s13, 7
      %p114 = por %p112, %p113
      %p115 = scmp.ne.s32.totalorder %s107, %s110
      %p116 = scmp.eq.s32.totalorder %s13, 0
      %p117 = por %p115, %p116
      %p118 = scmp.ne.s32.totalorder %s107, %s110
      %p119 = scmp.eq.s32.totalorder %s18, 7
      %p120 = por %p118, %p119
      %p121 = scmp.ne.s32.totalorder %s110, %s111
      %p122 = scmp.eq.s32.totalorder %s18, 0
      %p123 = por %p121, %p122
      %p124 = scmp.ne.s32.totalorder %s110, %s111
      %p125 = scmp.eq.s32.totalorder %s19, 7
      %p126 = por %p124, %p125
      %p128 = scmp.ne.s32.totalorder %s111, %s127
      %p129 = scmp.eq.s32.totalorder %s19, 0
      %p130 = por %p128, %p129
      %p131 = scmp.le.s32.totalorder 1, %s13
      %p132 = scmp.lt.s32.totalorder %s13, 9
      %p133 = pnand %p131, %p132
      %p134 = pneg %p133
      // Predicated region
      $region9: #{tpu_custom_call.1} parent=5 // pred_check
        _
      $region10: #{tpu_custom_call.1} parent=5 // pred_check_branch
        %136 = sbr.rel (%p133) target = $region12
      $region11: #{tpu_custom_call.1} parent=5 // pred_region
        %s137 = ssub.s32 %s13, 1
        // Predicated region
        $region13: #{tpu_custom_call.1} parent=11 // pred_check
          %p138 = pneg %p74
        $region14: #{tpu_custom_call.1} parent=11 // pred_check_branch
          %140 = sbr.rel (%p138) target = $region16
        $region15: #{tpu_custom_call.1} parent=11 // pred_region
          %s142 = ssub.s32 4096, 4096
          %143 = vsyncadd [#allocation5], %s142
          %s144 = sshll.u32 [#allocation4], 4
          %s145 = int_to_ptr.vmem [resolvable:$true] %s144
          %150 = dma.hbm_to_vmem [thread:$0]  %s1, 4096, %s145, [#allocation5], 256, 256, 16
        $region16: #{tpu_custom_call.1} parent=11 // pred_fallthru
          _
        // Predicated region
        $region17: #{tpu_custom_call.1} parent=11 // pred_check
          %p151 = pneg %p95
        $region18: #{tpu_custom_call.1} parent=11 // pred_check_branch
          %153 = sbr.rel (%p151) target = $region20
        $region19: #{tpu_custom_call.1} parent=11 // pred_region
          %s155 = ssub.s32 2048, 2048
          %156 = vsyncadd [#allocation5], %s155
          %s157 = sshll.u32 [#allocation6], 4
          %s158 = int_to_ptr.vmem [resolvable:$true] %s157
          %163 = dma.hbm_to_vmem [thread:$0]  %s2, 2048, %s158, [#allocation5], 128, 128, 8
        $region20: #{tpu_custom_call.1} parent=11 // pred_fallthru
          _
      $region12: #{tpu_custom_call.1} parent=5 // pred_fallthru
        _
      %p164 = scmp.lt.s32.totalorder %s13, 8
      // Predicated region
      $region21: #{tpu_custom_call.1} parent=5 // pred_check
        %p165 = pneg %p164
      $region22: #{tpu_custom_call.1} parent=5 // pred_check_branch
        %167 = sbr.rel (%p165) target = $region24
      $region23: #{tpu_custom_call.1} parent=5 // pred_region
        // Predicated region
        $region25: #{tpu_custom_call.1} parent=23 // pred_check
          %p168 = pneg %p47
        $region26: #{tpu_custom_call.1} parent=23 // pred_check_branch
          %170 = sbr.rel (%p168) target = $region28
        $region27: #{tpu_custom_call.1} parent=23 // pred_region
          %s171 = sand.u32 %s37, 1
          %s172 = scalar_lea.sflag [#allocation3], %s171
          %s173 = sand.u32 %s37, 1
          %s174 = smul.addr %s173, 16
          %s175 = scalar_lea.vmem [#allocation2], %s174
          %s176 = smul.u32 2, %s21
          %s178 = ssub.s32 256, 256
          %179 = vsyncadd %s172, %s178
          %s180 = smul.addr %s20, 2
          %s181 = sadd.s32 %s176, %s180
          %s182 = smul.addr %s181, 128
          %s183 = scalar_lea.hbm %s0, %s182
          %s184 = sshll.u32 %s175, 4
          %s185 = int_to_ptr.vmem [resolvable:$true] %s184
          %190 = dma.hbm_to_vmem [thread:$0]  %s183, 256, %s185, %s172, 128, 128, 8
        $region28: #{tpu_custom_call.1} parent=23 // pred_fallthru
          _
      $region24: #{tpu_custom_call.1} parent=5 // pred_fallthru
        _
      %p191 = scmp.le.s32.totalorder 1, %s13
      %p192 = scmp.lt.s32.totalorder %s13, 9
      %p193 = pnand %p191, %p192
      %p194 = pneg %p193
      // Predicated region
      $region29: #{tpu_custom_call.1} parent=5 // pred_check
        _
      $region30: #{tpu_custom_call.1} parent=5 // pred_check_branch
        %196 = sbr.rel (%p193) target = $region32
      $region31: #{tpu_custom_call.1} parent=5 // pred_region
        %s197 = ssub.s32 %s13, 1
        %s198 = sand.u32 %s40, 1
        %s199 = scalar_lea.sflag [#allocation3], %s198
        %s200 = sand.u32 %s40, 1
        %s201 = smul.addr %s200, 16
        %s202 = scalar_lea.vmem [#allocation2], %s201
        // Predicated region
        $region33: #{tpu_custom_call.1} parent=31 // pred_check
          %p203 = pneg %p53
        $region34: #{tpu_custom_call.1} parent=31 // pred_check_branch
          %205 = sbr.rel (%p203) target = $region36
        $region35: #{tpu_custom_call.1} parent=31 // pred_region
          %206 = dma.done %s199, 256
        $region36: #{tpu_custom_call.1} parent=31 // pred_fallthru
          _
        // Predicated region
        $region37: #{tpu_custom_call.1} parent=31 // pred_check
          %p207 = pneg %p74
        $region38: #{tpu_custom_call.1} parent=31 // pred_check_branch
          %209 = sbr.rel (%p207) target = $region40
        $region39: #{tpu_custom_call.1} parent=31 // pred_region
          %210 = dma.done [#allocation5], 4096
        $region40: #{tpu_custom_call.1} parent=31 // pred_fallthru
          _
        // Predicated region
        $region41: #{tpu_custom_call.1} parent=31 // pred_check
          %p211 = pneg %p95
        $region42: #{tpu_custom_call.1} parent=31 // pred_check_branch
          %213 = sbr.rel (%p211) target = $region44
        $region43: #{tpu_custom_call.1} parent=31 // pred_region
          %214 = dma.done [#allocation5], 2048
        $region44: #{tpu_custom_call.1} parent=31 // pred_fallthru
          _
        %s215 = sand.u32 %s40, 1
        %s216 = scalar_lea.sflag [#allocation3], %s215
        %s217 = sand.u32 %s40, 1
        %s218 = smul.addr %s217, 16
        %s219 = scalar_lea.vmem [#allocation2], %s218
        %p220 = pneg %p53
        %p221 = pneg %p50
        %p222 = pneg %p74
        %p223 = pneg %p71
        %p224 = pneg %p95
        %p225 = pneg %p92
        %p226 = pneg %p123
        %p227 = pneg %p120
        %p228 = scmp.lt.s32.totalorder %s22, 7
        %s229 = scalar_select %p228, %s22, 7
        %p230 = scmp.lt.s32.totalorder %s23, 0
        %s231 = scalar_select %p230, %s23, 0
        %s232 = smul.addr %s229, 16
        %s233 = sadd.s32 %s231, %s232
        %s234 = smul.addr %s233, 8
        %s235 = scalar_lea.vmem %s3, %s234
        %s236 = smul.u32 2, %s23
        %p237 = scmp.lt.s32.totalorder %s22, 7
        %s238 = scalar_select %p237, %s22, 7
        %p239 = scmp.lt.s32.totalorder %s23, 0
        %s240 = scalar_select %p239, %s23, 0
        %s241 = smul.addr %s238, 16
        %s242 = sadd.s32 %s240, %s241
        %s243 = smul.addr %s242, 8
        %s244 = scalar_lea.vmem %s3, %s243
        %v245 = vld [vmem:[%s202] sm:$0xff]
        %v246 = vld [vmem:[%s202 + $0x8] sm:$0xff]
        %v247 = vld [vmem:[#allocation4] sm:$0xff]
        %v248 = vld [vmem:[#allocation4 + $0x8] sm:$0xff]
        %v249 = vld [vmem:[#allocation4 + $0x10] sm:$0xff]
        %v250 = vld [vmem:[#allocation4 + $0x18] sm:$0xff]
        %v251 = vld [vmem:[#allocation4 + $0x20] sm:$0xff]
        %v252 = vld [vmem:[#allocation4 + $0x28] sm:$0xff]
        %v253 = vld [vmem:[#allocation4 + $0x30] sm:$0xff]
        %v254 = vld [vmem:[#allocation4 + $0x38] sm:$0xff]
        %v255 = vld [vmem:[#allocation4 + $0x40] sm:$0xff]
        %v256 = vld [vmem:[#allocation4 + $0x48] sm:$0xff]
        %v257 = vld [vmem:[#allocation4 + $0x50] sm:$0xff]
        %v258 = vld [vmem:[#allocation4 + $0x58] sm:$0xff]
        %v259 = vld [vmem:[#allocation4 + $0x60] sm:$0xff]
        %v260 = vld [vmem:[#allocation4 + $0x68] sm:$0xff]
        %v261 = vld [vmem:[#allocation4 + $0x70] sm:$0xff]
        %v262 = vld [vmem:[#allocation4 + $0x78] sm:$0xff]
        %v263 = vld [vmem:[#allocation4 + $0x80] sm:$0xff]
        %v264 = vld [vmem:[#allocation4 + $0x88] sm:$0xff]
        %v265 = vld [vmem:[#allocation4 + $0x90] sm:$0xff]
        %v266 = vld [vmem:[#allocation4 + $0x98] sm:$0xff]
        %v267 = vld [vmem:[#allocation4 + $0xa0] sm:$0xff]
        %v268 = vld [vmem:[#allocation4 + $0xa8] sm:$0xff]
        %v269 = vld [vmem:[#allocation4 + $0xb0] sm:$0xff]
        %v270 = vld [vmem:[#allocation4 + $0xb8] sm:$0xff]
        %v271 = vld [vmem:[#allocation4 + $0xc0] sm:$0xff]
        %v272 = vld [vmem:[#allocation4 + $0xc8] sm:$0xff]
        %v273 = vld [vmem:[#allocation4 + $0xd0] sm:$0xff]
        %v274 = vld [vmem:[#allocation4 + $0xd8] sm:$0xff]
        %v275 = vld [vmem:[#allocation4 + $0xe0] sm:$0xff]
        %v276 = vld [vmem:[#allocation4 + $0xe8] sm:$0xff]
        %v277 = vld [vmem:[#allocation4 + $0xf0] sm:$0xff]
        %v278 = vld [vmem:[#allocation4 + $0xf8] sm:$0xff]
        %279 = vmatprep.subr.mxu0 %v278
        %280 = vmatpush1.msra.mxu0 %v277
        %281 = vmatprep.subr.mxu0 %v276
        %282 = vmatpush1.msra.mxu0 %v275
        %283 = vmatprep.subr.mxu0 %v274
        %284 = vmatpush1.msra.mxu0 %v273
        %285 = vmatprep.subr.mxu0 %v272
        %286 = vmatpush1.msra.mxu0 %v271
        %287 = vmatprep.subr.mxu0 %v270
        %288 = vmatpush1.msra.mxu0 %v269
        %289 = vmatprep.subr.mxu0 %v268
        %290 = vmatpush1.msra.mxu0 %v267
        %291 = vmatprep.subr.mxu0 %v266
        %292 = vmatpush1.msra.mxu0 %v265
        %293 = vmatprep.subr.mxu0 %v264
        %294 = vmatpush1.msra.mxu0 %v263
        %295 = vmatprep.subr.mxu0 %v262
        %296 = vmatpush1.msra.mxu0 %v261
        %297 = vmatprep.subr.mxu0 %v260
        %298 = vmatpush1.msra.mxu0 %v259
        %299 = vmatprep.subr.mxu0 %v258
        %300 = vmatpush1.msra.mxu0 %v257
        %301 = vmatprep.subr.mxu0 %v256
        %302 = vmatpush1.msra.mxu0 %v255
        %303 = vmatprep.subr.mxu0 %v254
        %304 = vmatpush1.msra.mxu0 %v253
        %305 = vmatprep.subr.mxu0 %v252
        %306 = vmatpush1.msra.mxu0 %v251
        %307 = vmatprep.subr.mxu0 %v250
        %308 = vmatpush1.msra.mxu0 %v249
        %309 = vmatprep.subr.mxu0 %v248
        %310 = vmatpush1.msra.mxu0 %v247
        %311 = vmatprep.subr.mxu0 0.0
        %312 = vmatpush2.msra.mxu0 0.0
        %313 = vmatprep.subr.mxu0 0.0
        %314 = vmatpush2.msra.mxu0 0.0
        %315 = vmatprep.subr.mxu0 0.0
        %316 = vmatpush2.msra.mxu0 0.0
        %317 = vmatprep.subr.mxu0 0.0
        %318 = vmatpush2.msra.mxu0 0.0
        %319 = vmatprep.subr.mxu0 0.0
        %320 = vmatpush2.msra.mxu0 0.0
        %321 = vmatprep.subr.mxu0 0.0
        %322 = vmatpush2.msra.mxu0 0.0
        %323 = vmatprep.subr.mxu0 0.0
        %324 = vmatpush2.msra.mxu0 0.0
        %325 = vmatprep.subr.mxu0 0.0
        %326 = vmatpush2.msra.mxu0 0.0
        %327 = vmatprep.subr.mxu0 0.0
        %328 = vmatpush2.msra.mxu0 0.0
        %329 = vmatprep.subr.mxu0 0.0
        %330 = vmatpush2.msra.mxu0 0.0
        %331 = vmatprep.subr.mxu0 0.0
        %332 = vmatpush2.msra.mxu0 0.0
        %333 = vmatprep.subr.mxu0 0.0
        %334 = vmatpush2.msra.mxu0 0.0
        %335 = vmatprep.subr.mxu0 0.0
        %336 = vmatpush2.msra.mxu0 0.0
        %337 = vmatprep.subr.mxu0 0.0
        %338 = vmatpush2.msra.mxu0 0.0
        %339 = vmatprep.subr.mxu0 0.0
        %340 = vmatpush2.msra.mxu0 0.0
        %341 = vmatprep.subr.mxu0 0.0
        %342 = vmatpush2.msra.mxu0 0.0
        %343 = vmatprep.mubr.f32.mxu0 0.0
        %344 = vmatmul.mubr.f32.gmra.mxu0 %v245
        %v345 = vpop.f32.mrf.mxu0
        %v346 = vadd.f32 0.0, %v345
        %v347 = vpop.f32.mrf.mxu0
        %v348 = vadd.f32 0.0, %v347
        %349 = vmatprep.mubr.f32.mxu0 0.0
        %350 = vmatmul.mubr.f32.gmra.mxu0 %v246
        %v351 = vpop.f32.mrf.mxu0
        %v352 = vadd.f32 0.0, %v351
        %v353 = vpop.f32.mrf.mxu0
        %v354 = vadd.f32 0.0, %v353
        %355 = vdwg.mxu0
        %v356 = vmul.f32 %v346, %v346
        %v357 = vmul.f32 %v352, %v352
        %v358 = vmul.f32 %v348, %v348
        %v359 = vmul.f32 %v354, %v354
        %v360 = vadd.f32 %v356, %v358
        %v361 = vadd.f32 %v357, %v359
        %v362 = vld [vmem:[#allocation6] sm:$0xff]
        %v363 = vld [vmem:[#allocation6 + $0x8] sm:$0xff]
        %v364 = vld [vmem:[#allocation6 + $0x10] sm:$0xff]
        %v365 = vld [vmem:[#allocation6 + $0x18] sm:$0xff]
        %v366 = vld [vmem:[#allocation6 + $0x20] sm:$0xff]
        %v367 = vld [vmem:[#allocation6 + $0x28] sm:$0xff]
        %v368 = vld [vmem:[#allocation6 + $0x30] sm:$0xff]
        %v369 = vld [vmem:[#allocation6 + $0x38] sm:$0xff]
        %v370 = vld [vmem:[#allocation6 + $0x40] sm:$0xff]
        %v371 = vld [vmem:[#allocation6 + $0x48] sm:$0xff]
        %v372 = vld [vmem:[#allocation6 + $0x50] sm:$0xff]
        %v373 = vld [vmem:[#allocation6 + $0x58] sm:$0xff]
        %v374 = vld [vmem:[#allocation6 + $0x60] sm:$0xff]
        %v375 = vld [vmem:[#allocation6 + $0x68] sm:$0xff]
        %v376 = vld [vmem:[#allocation6 + $0x70] sm:$0xff]
        %v377 = vld [vmem:[#allocation6 + $0x78] sm:$0xff]
        %378 = vmatprep.subr.mxu0 0.0
        %379 = vmatpush1.msra.mxu0 %v377
        %380 = vmatprep.subr.mxu0 0.0
        %381 = vmatpush1.msra.mxu0 %v376
        %382 = vmatprep.subr.mxu0 0.0
        %383 = vmatpush1.msra.mxu0 %v375
        %384 = vmatprep.subr.mxu0 0.0
        %385 = vmatpush1.msra.mxu0 %v374
        %386 = vmatprep.subr.mxu0 0.0
        %387 = vmatpush1.msra.mxu0 %v373
        %388 = vmatprep.subr.mxu0 0.0
        %389 = vmatpush1.msra.mxu0 %v372
        %390 = vmatprep.subr.mxu0 0.0
        %391 = vmatpush1.msra.mxu0 %v371
        %392 = vmatprep.subr.mxu0 0.0
        %393 = vmatpush1.msra.mxu0 %v370
        %394 = vmatprep.subr.mxu0 0.0
        %395 = vmatpush1.msra.mxu0 %v369
        %396 = vmatprep.subr.mxu0 0.0
        %397 = vmatpush1.msra.mxu0 %v368
        %398 = vmatprep.subr.mxu0 0.0
        %399 = vmatpush1.msra.mxu0 %v367
        %400 = vmatprep.subr.mxu0 0.0
        %401 = vmatpush1.msra.mxu0 %v366
        %402 = vmatprep.subr.mxu0 0.0
        %403 = vmatpush1.msra.mxu0 %v365
        %404 = vmatprep.subr.mxu0 0.0
        %405 = vmatpush1.msra.mxu0 %v364
        %406 = vmatprep.subr.mxu0 0.0
        %407 = vmatpush1.msra.mxu0 %v363
        %408 = vmatprep.subr.mxu0 0.0
        %409 = vmatpush1.msra.mxu0 %v362
        %410 = vmatprep.subr.mxu0 0.0
        %411 = vmatpush2.msra.mxu0 0.0
        %412 = vmatprep.subr.mxu0 0.0
        %413 = vmatpush2.msra.mxu0 0.0
        %414 = vmatprep.subr.mxu0 0.0
        %415 = vmatpush2.msra.mxu0 0.0
        %416 = vmatprep.subr.mxu0 0.0
        %417 = vmatpush2.msra.mxu0 0.0
        %418 = vmatprep.subr.mxu0 0.0
        %419 = vmatpush2.msra.mxu0 0.0
        %420 = vmatprep.subr.mxu0 0.0
        %421 = vmatpush2.msra.mxu0 0.0
        %422 = vmatprep.subr.mxu0 0.0
        %423 = vmatpush2.msra.mxu0 0.0
        %424 = vmatprep.subr.mxu0 0.0
        %425 = vmatpush2.msra.mxu0 0.0
        %426 = vmatprep.subr.mxu0 0.0
        %427 = vmatpush2.msra.mxu0 0.0
        %428 = vmatprep.subr.mxu0 0.0
        %429 = vmatpush2.msra.mxu0 0.0
        %430 = vmatprep.subr.mxu0 0.0
        %431 = vmatpush2.msra.mxu0 0.0
        %432 = vmatprep.subr.mxu0 0.0
        %433 = vmatpush2.msra.mxu0 0.0
        %434 = vmatprep.subr.mxu0 0.0
        %435 = vmatpush2.msra.mxu0 0.0
        %436 = vmatprep.subr.mxu0 0.0
        %437 = vmatpush2.msra.mxu0 0.0
        %438 = vmatprep.subr.mxu0 0.0
        %439 = vmatpush2.msra.mxu0 0.0
        %440 = vmatprep.subr.mxu0 0.0
        %441 = vmatpush2.msra.mxu0 0.0
        %442 = vmatprep.mubr.f32.mxu0 0.0
        %443 = vmatmul.mubr.f32.gmra.mxu0 %v360
        %v444 = vpop.f32.mrf.mxu0
        %v445 = vadd.f32 0.0, %v444
        %v446 = vpop.f32.mrf.mxu0
        %447 = vmatprep.mubr.f32.mxu0 0.0
        %448 = vmatmul.mubr.f32.gmra.mxu0 %v361
        %v449 = vpop.f32.mrf.mxu0
        %v450 = vadd.f32 0.0, %v449
        %v451 = vpop.f32.mrf.mxu0
        %452 = vdwg.mxu0
        %453 = vxpose.xlu0.b32.start [1/16] %v445, 128
        %454 = vxpose.xlu0.b32.cont [2/16] %v450, 128
        %455 = vxpose.xlu0.b32.cont [3/16] 0.0, 128
        %456 = vxpose.xlu0.b32.cont [4/16] 0.0, 128
        %457 = vxpose.xlu0.b32.cont [5/16] 0.0, 128
        %458 = vxpose.xlu0.b32.cont [6/16] 0.0, 128
        %459 = vxpose.xlu0.b32.cont [7/16] 0.0, 128
        %460 = vxpose.xlu0.b32.cont [8/16] 0.0, 128
        %461 = vxpose.xlu0.b32.cont [9/16] 0.0, 128
        %462 = vxpose.xlu0.b32.cont [10/16] 0.0, 128
        %463 = vxpose.xlu0.b32.cont [11/16] 0.0, 128
        %464 = vxpose.xlu0.b32.cont [12/16] 0.0, 128
        %465 = vxpose.xlu0.b32.cont [13/16] 0.0, 128
        %466 = vxpose.xlu0.b32.cont [14/16] 0.0, 128
        %467 = vxpose.xlu0.b32.cont [15/16] 0.0, 128
        %468 = vxpose.xlu0.b32.end [16/16] 0.0, 128
        %v469 = vpop.trf.xlu0
        %v470 = vpop.trf.xlu0
        %v471 = vpop.trf.xlu0
        %v472 = vpop.trf.xlu0
        %v473 = vpop.trf.xlu0
        %v474 = vpop.trf.xlu0
        %v475 = vpop.trf.xlu0
        %v476 = vpop.trf.xlu0
        %v477 = vpop.trf.xlu0
        %v478 = vpop.trf.xlu0
        %v479 = vpop.trf.xlu0
        %v480 = vpop.trf.xlu0
        %v481 = vpop.trf.xlu0
        %v482 = vpop.trf.xlu0
        %v483 = vpop.trf.xlu0
        %v484 = vpop.trf.xlu0
        %vm485 = vcmask 130048
        %486 = vst.msk [vmem:[%s244] sm:$0xff] %vm485, %v469
        %487 = vst.msk [vmem:[%s244 + $0x8] sm:$0xff] %vm485, %v470
        %488 = vst.msk [vmem:[%s244 + $0x10] sm:$0xff] %vm485, %v471
        %489 = vst.msk [vmem:[%s244 + $0x18] sm:$0xff] %vm485, %v472
        %490 = vst.msk [vmem:[%s244 + $0x20] sm:$0xff] %vm485, %v473
        %491 = vst.msk [vmem:[%s244 + $0x28] sm:$0xff] %vm485, %v474
        %492 = vst.msk [vmem:[%s244 + $0x30] sm:$0xff] %vm485, %v475
        %493 = vst.msk [vmem:[%s244 + $0x38] sm:$0xff] %vm485, %v476
        %494 = vst.msk [vmem:[%s244 + $0x40] sm:$0xff] %vm485, %v477
        %495 = vst.msk [vmem:[%s244 + $0x48] sm:$0xff] %vm485, %v478
        %496 = vst.msk [vmem:[%s244 + $0x50] sm:$0xff] %vm485, %v479
        %497 = vst.msk [vmem:[%s244 + $0x58] sm:$0xff] %vm485, %v480
        %498 = vst.msk [vmem:[%s244 + $0x60] sm:$0xff] %vm485, %v481
        %499 = vst.msk [vmem:[%s244 + $0x68] sm:$0xff] %vm485, %v482
        %500 = vst.msk [vmem:[%s244 + $0x70] sm:$0xff] %vm485, %v483
        %501 = vst.msk [vmem:[%s244 + $0x78] sm:$0xff] %vm485, %v484
        %p502 = scmp.lt.s32.totalorder %s22, 7
        %s503 = scalar_select %p502, %s22, 7
        %p504 = scmp.lt.s32.totalorder %s23, 0
        %s505 = scalar_select %p504, %s23, 0
        %s506 = smul.addr %s503, 16
        %s507 = sadd.s32 %s505, %s506
        %s508 = smul.addr %s507, 8
        %s509 = scalar_lea.vmem %s3, %s508
        // Predicated region
        $region45: #{tpu_custom_call.1} parent=31 // pred_check
          %p510 = pneg %p120
        $region46: #{tpu_custom_call.1} parent=31 // pred_check_branch
          %512 = sbr.rel (%p510) target = $region48
        $region47: #{tpu_custom_call.1} parent=31 // pred_region
          _
        $region48: #{tpu_custom_call.1} parent=31 // pred_fallthru
          _
      $region32: #{tpu_custom_call.1} parent=5 // pred_fallthru
        _
      %p513 = scmp.le.s32.totalorder 2, %s13
      // Predicated region
      $region49: #{tpu_custom_call.1} parent=5 // pred_check
        %p514 = pneg %p513
      $region50: #{tpu_custom_call.1} parent=5 // pred_check_branch
        %516 = sbr.rel (%p514) target = $region52
      $region51: #{tpu_custom_call.1} parent=5 // pred_region
        %s517 = ssub.s32 %s13, 2
        // Predicated region
        $region53: #{tpu_custom_call.1} parent=51 // pred_check
          %p518 = pneg %p126
        $region54: #{tpu_custom_call.1} parent=51 // pred_check_branch
          %520 = sbr.rel (%p518) target = $region56
        $region55: #{tpu_custom_call.1} parent=51 // pred_region
          %p521 = scmp.lt.s32.totalorder %s24, 7
          %s522 = scalar_select %p521, %s24, 7
          %p523 = scmp.lt.s32.totalorder %s25, 0
          %s524 = scalar_select %p523, %s25, 0
          %s525 = smul.addr %s522, 16
          %s526 = sadd.s32 %s524, %s525
          %s527 = smul.addr %s526, 8
          %s528 = scalar_lea.vmem %s3, %s527
        $region56: #{tpu_custom_call.1} parent=51 // pred_fallthru
          _
      $region52: #{tpu_custom_call.1} parent=5 // pred_fallthru
        _
    $region6: #{tpu_custom_call.1} parent=1 // loop_footer
      %s17 = sadd.s32 1, %s13
    $region7: #{tpu_custom_call.1} parent=1 // loop_footer_branch
      %12 = sbr.rel target = $region3
    $region8: #{tpu_custom_call.1} parent=1 // loop_exit
      _
    %529 = vsyncpa [#allocation3], 1
    %s530 = scalar_lea.sflag [#allocation3], 1
    %531 = vsyncpa %s530, 1
    %532 = vsyncpa [#allocation5], 1

</llo_original>
